<compile_context>
chip_gen: v6e
topology: v6e:2x2x1
jax: 0.10.0
libtpu: 0.0.40
codegen_flags: <defaults>
</compile_context>

<pallas_src>
import functools

import jax
import jax.numpy as jnp
from jax.experimental import pallas as pl
from jax.experimental.pallas import tpu as pltpu

_LANE = 128
_MIN_BLOCK_BYTES = 4 << 20     # target blocks >= 4 MiB when possible
_MAX_BLOCK_BYTES = 16 << 20    # ... and <= 16 MiB so the grid has >=3 steps


def _round_up(n, m):
    return ((n + m - 1) // m) * m


def _cdiv(a, b):
    return -(-a // b)


def _sublane_multiple(dtype):
    # Second-minor tiling: f32 -> 8, bf16 -> 16, int8/fp8 -> 32 sublanes.
    itemsize = jnp.dtype(dtype).itemsize
    return 8 * max(1, 4 // max(1, itemsize))


def _padded_tile_bytes(r, c, dtype=jnp.float32):
    itemsize = jnp.dtype(dtype).itemsize
    return (_round_up(max(r, 1), _sublane_multiple(dtype))
            * _round_up(max(c, 1), _LANE) * itemsize)


def _vmem_caps():
    """Returns (budget_bytes, vmem_limit_bytes) — generation aware."""
    try:
        cap = int(pltpu.get_tpu_info().vmem_capacity_bytes)
    except Exception:
        cap = 64 * 1024 * 1024          # conservative (v7x has 64 MiB per TC)
    cap = max(32 * 1024 * 1024, min(cap, 128 * 1024 * 1024))
    budget = int(cap * 0.75)            # ~48 MiB v7x, ~96 MiB v5e/v6e
    return budget, cap


def _choose_batch_tile(B, per_batch_bytes, aux_bytes, budget):
    """Pick TB for the fused path; None if even TB=1 does not fit."""
    # 4 block-sized buffers per row: double-buffered input + output.
    fits = [tb for tb in range(1, B + 1)
            if 4 * tb * per_batch_bytes + aux_bytes <= budget]
    if not fits:
        return None
    steps = lambda tb: _cdiv(B, tb)
    blk = lambda tb: tb * per_batch_bytes
    tiers = [
        # 4-16 MiB blocks, >=4 even steps: pipelines + shards across 2 TCs.
        [tb for tb in fits if _MIN_BLOCK_BYTES <= blk(tb) <= _MAX_BLOCK_BYTES
         and steps(tb) >= 4 and steps(tb) % 2 == 0],
        # 4-16 MiB blocks, >=3 steps.
        [tb for tb in fits if _MIN_BLOCK_BYTES <= blk(tb) <= _MAX_BLOCK_BYTES
         and steps(tb) >= 3],
        # >=2 even steps (dual-TC balance), biggest block that fits.
        [tb for tb in fits if steps(tb) >= 2 and steps(tb) % 2 == 0],
        # >=2 steps.
        [tb for tb in fits if steps(tb) >= 2],
        fits,
    ]
    for tier in tiers:
        if tier:
            return max(tier)
    return None


# ---------------------------------------------------------------------------
# Fused single-pass kernel: block = (TB, C, S), everything in one grid step.
# ---------------------------------------------------------------------------
def _se_fused_kernel(x_ref, w1t_ref, b1_ref, w2t_ref, b2_ref, o_ref, *, inv_s):
    x = x_ref[...]                                              # (TB, C, S)
    # Squeeze: spatial mean, accumulated in f32 without a full f32 temp.
    pooled = jnp.sum(x, axis=2, dtype=jnp.float32) * inv_s      # (TB, C)
    # Excite: the two tiny FCs, batched over the TB rows (one matmul each).
    h = jnp.dot(pooled, w1t_ref[...],
                preferred_element_type=jnp.float32) + b1_ref[...]
    h = jnp.maximum(h, 0.0)                                     # (TB, Cr)
    z = jnp.dot(h, w2t_ref[...],
                preferred_element_type=jnp.float32) + b2_ref[...]
    scale = jax.nn.sigmoid(z)                                   # (TB, C)
    # Re-weight channels in the input dtype (only the tiny scale is cast).
    o_ref[...] = (x * scale[:, :, None].astype(x.dtype)).astype(o_ref.dtype)


# ---------------------------------------------------------------------------
# Two-pass fallback: (1) S-tiled squeeze + excite -> per-batch (C,1) scales,
#                    (2) S-tiled channel re-scale.
# ---------------------------------------------------------------------------
def _se_squeeze_excite_kernel(x_ref, w1t_ref, b1_ref, w2t_ref, b2_ref,
                              scale_ref, acc_ref, *, inv_s, s_total, s_tile):
    si = pl.program_id(1)

    @pl.when(si == 0)
    def _():
        acc_ref[...] = jnp.zeros_like(acc_ref)

    x = x_ref[0]                                                # (C, St)
    # Mask the ragged last spatial tile: OOB block reads are undefined.
    col = jax.lax.broadcasted_iota(jnp.int32, x.shape, 1)
    valid = (si * s_tile + col) < s_total
    xz = jnp.where(valid, x, jnp.zeros_like(x))
    acc_ref[...] += jnp.sum(xz, axis=1, dtype=jnp.float32)[None, :]

    @pl.when(si == pl.num_programs(1) - 1)
    def _():
        pooled = acc_ref[...] * inv_s                           # (1, C)
        h = jnp.dot(pooled, w1t_ref[...],
                    preferred_element_type=jnp.float32) + b1_ref[...]
        h = jnp.maximum(h, 0.0)                                 # (1, Cr)
        z = jnp.dot(h, w2t_ref[...],
                    preferred_element_type=jnp.float32) + b2_ref[...]
        scale_ref[...] = jax.nn.sigmoid(z)[:, :, None]          # (1, C, 1)


def _se_scale_kernel(scale_ref, x_ref, o_ref):
    x = x_ref[...]                                              # (1, C, St)
    # Ragged tail: OOB reads are garbage but those columns' writes are dropped.
    o_ref[...] = (x * scale_ref[...].astype(x.dtype)).astype(o_ref.dtype)


# ---------------------------------------------------------------------------
# Wrapper
# ---------------------------------------------------------------------------
def se_blocks_forward(x, w1, b1, w2, b2, *, force_two_pass=False, s_tile=None):
    """SE_Blocks forward.

    x: (B, C, D, H, W); w1: (Cr, C); b1: (Cr,); w2: (C, Cr); b2: (C,)
    (PyTorch nn.Linear layout).
    """
    B, C, D, H, W = x.shape
    Cr = w1.shape[0]
    S = D * H * W
    itemsize = jnp.dtype(x.dtype).itemsize

    # Pre-transpose the FC weights once so the kernel needs no transposes.
    w1t = jnp.asarray(w1).T.astype(jnp.float32)                 # (C, Cr)
    w2t = jnp.asarray(w2).T.astype(jnp.float32)                 # (Cr, C)
    b1r = jnp.asarray(b1).reshape(1, Cr).astype(jnp.float32)
    b2r = jnp.asarray(b2).reshape(1, C).astype(jnp.float32)
    inv_s = 1.0 / float(S)

    x_flat = x.reshape(B, C, S)                                 # free reshape

    budget, vmem_limit = _vmem_caps()

    # Padded VMEM footprint of one batch row of a (TB, C, S) block
    # (dtype-aware sublane/lane tiling).
    c_pad = _round_up(C, _sublane_multiple(x.dtype))
    s_pad = _round_up(S, _LANE)
    per_batch_bytes = c_pad * s_pad * itemsize

    # Small resident weight/bias tiles (double-buffered) plus generic slack.
    weights_bytes = 2 * (_padded_tile_bytes(C, Cr) + _padded_tile_bytes(Cr, C)
                         + _padded_tile_bytes(1, Cr) + _padded_tile_bytes(1, C))
    aux_bytes = weights_bytes + (2 << 20)

    TB = None
    if not force_two_pass:
        TB = _choose_batch_tile(B, per_batch_bytes, aux_bytes, budget)

    if TB is not None:
        # ---- Fused single-pass path (1 HBM read + 1 HBM write of x) --------
        grid_b = _cdiv(B, TB)                                   # ragged OK
        kernel = functools.partial(_se_fused_kernel, inv_s=inv_s)
        out_flat = pl.pallas_call(
            kernel,
            out_shape=jax.ShapeDtypeStruct((B, C, S), x.dtype),
            grid_spec=pltpu.PrefetchScalarGridSpec(
                num_scalar_prefetch=0,
                grid=(grid_b,),
                in_specs=[
                    pl.BlockSpec((TB, C, S), lambda b: (b, 0, 0)),
                    pl.BlockSpec((C, Cr), lambda b: (0, 0)),
                    pl.BlockSpec((1, Cr), lambda b: (0, 0)),
                    pl.BlockSpec((Cr, C), lambda b: (0, 0)),
                    pl.BlockSpec((1, C), lambda b: (0, 0)),
                ],
                out_specs=pl.BlockSpec((TB, C, S), lambda b: (b, 0, 0)),
            ),
            compiler_params=pltpu.CompilerParams(
                dimension_semantics=("parallel",),
                vmem_limit_bytes=vmem_limit),
        )(x_flat, w1t, b1r, w2t, b2r)
        return out_flat.reshape(B, C, D, H, W)

    # ---- Two-pass fallback (VMEM-tight shapes, e.g. v7x) --------------------
    def pick_st(buffers):
        avail = max(budget - aux_bytes, buffers * c_pad * _LANE * itemsize)
        max_cols = avail // (buffers * c_pad * itemsize)
        if max_cols >= S:
            return S
        return max(_LANE, (max_cols // _LANE) * _LANE)

    if s_tile is not None:
        st = _round_up(int(s_tile), _LANE)
        st1 = st2 = S if st >= S else st
    else:
        st1 = pick_st(buffers=2)        # pass 1: only x is double-buffered
        st2 = pick_st(buffers=4)        # pass 2: x + out double-buffered
    n1 = _cdiv(S, st1)
    n2 = _cdiv(S, st2)

    sq_kernel = functools.partial(_se_squeeze_excite_kernel,
                                  inv_s=inv_s, s_total=S, s_tile=st1)
    scales = pl.pallas_call(
        sq_kernel,
        out_shape=jax.ShapeDtypeStruct((B, C, 1), jnp.float32),
        grid_spec=pltpu.PrefetchScalarGridSpec(
            num_scalar_prefetch=0,
            grid=(B, n1),
            in_specs=[
                pl.BlockSpec((1, C, st1), lambda b, si: (b, 0, si)),
                pl.BlockSpec((C, Cr), lambda b, si: (0, 0)),
                pl.BlockSpec((1, Cr), lambda b, si: (0, 0)),
                pl.BlockSpec((Cr, C), lambda b, si: (0, 0)),
                pl.BlockSpec((1, C), lambda b, si: (0, 0)),
            ],
            out_specs=pl.BlockSpec((1, C, 1), lambda b, si: (b, 0, 0)),
            scratch_shapes=[pltpu.VMEM((1, C), jnp.float32)],
        ),
        compiler_params=pltpu.CompilerParams(
            dimension_semantics=("parallel", "arbitrary"),
            vmem_limit_bytes=vmem_limit),
    )(x_flat, w1t, b1r, w2t, b2r)

    out_flat = pl.pallas_call(
        _se_scale_kernel,
        out_shape=jax.ShapeDtypeStruct((B, C, S), x.dtype),
        grid_spec=pltpu.PrefetchScalarGridSpec(
            num_scalar_prefetch=0,
            grid=(B, n2),
            in_specs=[
                pl.BlockSpec((1, C, 1), lambda b, si: (b, 0, 0)),
                pl.BlockSpec((1, C, st2), lambda b, si: (b, 0, si)),
            ],
            out_specs=pl.BlockSpec((1, C, st2), lambda b, si: (b, 0, si)),
        ),
        compiler_params=pltpu.CompilerParams(
            dimension_semantics=("parallel", "parallel"),
            vmem_limit_bytes=vmem_limit),
    )(scales, x_flat)
    return out_flat.reshape(B, C, D, H, W)


def _reference(x, w1, b1, w2, b2):
    s = x.astype(jnp.float32).mean(axis=(2, 3, 4))              # (B, C)
    h = jax.nn.relu(s @ w1.T + b1)                              # (B, Cr)
    sc = jax.nn.sigmoid(h @ w2.T + b2)                          # (B, C)
    return (x * sc[:, :, None, None, None]).astype(x.dtype)


if __name__ == "__main__":
    # SE_Blocks(num_channels=8, ratio_channel=2)
    B, C, D, H, W = 2, 8, 8, 8, 8
    ratio = 2
    Cr = C // ratio

    key = jax.random.PRNGKey(0)
    kx, k1, k2, k3, k4, kx2, kx3 = jax.random.split(key, 7)

    x = jax.random.normal(kx, (B, C, D, H, W), dtype=jnp.float32)
    # Deterministic synthetic parameters (PyTorch nn.Linear layout).
    w1 = jax.random.normal(k1, (Cr, C), dtype=jnp.float32) * 0.3
    b1 = jax.random.normal(k2, (Cr,), dtype=jnp.float32) * 0.1
    w2 = jax.random.normal(k3, (C, Cr), dtype=jnp.float32) * 0.3
    b2 = jax.random.normal(k4, (C,), dtype=jnp.float32) * 0.1

    ref = _reference(x, w1, b1, w2, b2)

    # Path A: fused, batch-tiled single-pass kernel (S = 512, lane-aligned).
    out = jax.block_until_ready(se_blocks_forward(x, w1, b1, w2, b2))
    assert out.shape == (B, C, D, H, W)
    assert jnp.allclose(out, ref, atol=1e-5, rtol=1e-5)

    # Path A with non-lane-aligned S (5*6*7=210): no padding, masked tail store.
    D2, H2, W2 = 5, 6, 7
    x2 = jax.random.normal(kx2, (B, C, D2, H2, W2), dtype=jnp.float32)
    ref2 = _reference(x2, w1, b1, w2, b2)
    out2 = jax.block_until_ready(se_blocks_forward(x2, w1, b1, w2, b2))
    assert jnp.allclose(out2, ref2, atol=1e-5, rtol=1e-5)

    # Path A with a ragged batch grid (B=3 -> TB=2, last block partially OOB).
    x3 = jax.random.normal(kx3, (3, C, D, H, W), dtype=jnp.float32)
    ref3 = _reference(x3, w1, b1, w2, b2)
    out3 = jax.block_until_ready(se_blocks_forward(x3, w1, b1, w2, b2))
    assert jnp.allclose(out3, ref3, atol=1e-5, rtol=1e-5)

    # Path B: two-pass S-tiled fallback with a ragged last S tile (210 / 128).
    out4 = jax.block_until_ready(
        se_blocks_forward(x2, w1, b1, w2, b2, force_two_pass=True, s_tile=128))
    assert jnp.allclose(out4, ref2, atol=1e-5, rtol=1e-5)

    # Path B with auto tile sizes (here the tile covers the full S extent).
    out5 = jax.block_until_ready(
        se_blocks_forward(x, w1, b1, w2, b2, force_two_pass=True))
    assert jnp.allclose(out5, ref, atol=1e-5, rtol=1e-5)

    print("KERNEL_OK")
</pallas_src>

<mosaic_0001>
module attributes {stable_mosaic.version = 11 : i64} {
  func.func @_se_fused_kernel(%arg0: i32, %arg1: memref<1x8x512xf32, #tpu.memory_space<vmem>>, %arg2: memref<8x4xf32, #tpu.memory_space<vmem>>, %arg3: memref<1x4xf32, #tpu.memory_space<vmem>>, %arg4: memref<4x8xf32, #tpu.memory_space<vmem>>, %arg5: memref<1x8xf32, #tpu.memory_space<vmem>>, %arg6: memref<1x8x512xf32, #tpu.memory_space<vmem>>) attributes {dimension_semantics = [#tpu.dimension_semantics<parallel>], iteration_bounds = array<i64: 2>, scalar_prefetch = 0 : i64, scratch_operands = 0 : i64, tpu.core_type = #tpu.core_type<tc>, window_params = [{transform_indices = @transform_0, window_bounds = array<i64: 1, 8, 512>}, {pipeline_mode = #tpu.pipeline_mode<synchronous>, transform_indices = @transform_1, window_bounds = array<i64: 8, 4>}, {pipeline_mode = #tpu.pipeline_mode<synchronous>, transform_indices = @transform_2, window_bounds = array<i64: 1, 4>}, {pipeline_mode = #tpu.pipeline_mode<synchronous>, transform_indices = @transform_3, window_bounds = array<i64: 4, 8>}, {pipeline_mode = #tpu.pipeline_mode<synchronous>, transform_indices = @transform_4, window_bounds = array<i64: 1, 8>}, {transform_indices = @transform_5, window_bounds = array<i64: 1, 8, 512>}]} {
    %c0 = arith.constant 0 : index
    %c0_0 = arith.constant 0 : index
    %c0_1 = arith.constant 0 : index
    %0 = vector.load %arg1[%c0, %c0_0, %c0_1] : memref<1x8x512xf32, #tpu.memory_space<vmem>>, vector<1x8x512xf32>
    %cst = arith.constant dense<0.000000e+00> : vector<1x8xf32>
    %1 = vector.multi_reduction <add>, %0, %cst [2] : vector<1x8x512xf32> to vector<1x8xf32>
    %cst_2 = arith.constant 0.001953125 : f32
    %2 = vector.broadcast %cst_2 : f32 to vector<1x8xf32>
    %3 = arith.mulf %1, %2 : vector<1x8xf32>
    %c0_3 = arith.constant 0 : index
    %c0_4 = arith.constant 0 : index
    %4 = vector.load %arg2[%c0_3, %c0_4] : memref<8x4xf32, #tpu.memory_space<vmem>>, vector<8x4xf32>
    %cst_5 = arith.constant dense<0.000000e+00> : vector<1x4xf32>
    %5 = tpu.matmul %3, %4, %cst_5 {dimension_numbers = #tpu.dot_dimension_numbers<[1], [0], [0], [1], [0, 0, 1, 1], [], []>} : vector<1x8xf32>, vector<8x4xf32>, vector<1x4xf32> -> vector<1x4xf32>
    %c0_6 = arith.constant 0 : index
    %c0_7 = arith.constant 0 : index
    %6 = vector.load %arg3[%c0_6, %c0_7] : memref<1x4xf32, #tpu.memory_space<vmem>>, vector<1x4xf32>
    %7 = arith.addf %5, %6 : vector<1x4xf32>
    %cst_8 = arith.constant 0.000000e+00 : f32
    %8 = vector.broadcast %cst_8 : f32 to vector<1x4xf32>
    %9 = arith.maximumf %7, %8 : vector<1x4xf32>
    %c0_9 = arith.constant 0 : index
    %c0_10 = arith.constant 0 : index
    %10 = vector.load %arg4[%c0_9, %c0_10] : memref<4x8xf32, #tpu.memory_space<vmem>>, vector<4x8xf32>
    %cst_11 = arith.constant dense<0.000000e+00> : vector<1x8xf32>
    %11 = tpu.matmul %9, %10, %cst_11 {dimension_numbers = #tpu.dot_dimension_numbers<[1], [0], [0], [1], [0, 0, 1, 1], [], []>} : vector<1x4xf32>, vector<4x8xf32>, vector<1x8xf32> -> vector<1x8xf32>
    %c0_12 = arith.constant 0 : index
    %c0_13 = arith.constant 0 : index
    %12 = vector.load %arg5[%c0_12, %c0_13] : memref<1x8xf32, #tpu.memory_space<vmem>>, vector<1x8xf32>
    %13 = arith.addf %11, %12 : vector<1x8xf32>
    %14 = arith.negf %13 : vector<1x8xf32>
    %15 = math.exp %14 : vector<1x8xf32>
    %cst_14 = arith.constant 1.000000e+00 : f32
    %16 = vector.broadcast %cst_14 : f32 to vector<1x8xf32>
    %17 = arith.addf %16, %15 : vector<1x8xf32>
    %18 = arith.divf %16, %17 : vector<1x8xf32>
    %19 = vector.shape_cast %18 : vector<1x8xf32> to vector<1x8x1xf32>
    %20 = vector.broadcast %19 : vector<1x8x1xf32> to vector<1x8x512xf32>
    %21 = arith.mulf %0, %20 : vector<1x8x512xf32>
    %c0_15 = arith.constant 0 : index
    %c0_16 = arith.constant 0 : index
    %c0_17 = arith.constant 0 : index
    %22 = vector.load %arg6[%c0_15, %c0_16, %c0_17] : memref<1x8x512xf32, #tpu.memory_space<vmem>>, vector<1x8x512xf32>
    tpu.vector_store %arg6[%c0_15, %c0_16, %c0_17], %21 {strides = array<i32>} : memref<1x8x512xf32, #tpu.memory_space<vmem>>, vector<1x8x512xf32>,
    return
  }
  func.func @transform_0(%arg0: i32) -> (i32, i32, i32) {
    %c0_i32 = arith.constant 0 : i32
    %c0_i32_0 = arith.constant 0 : i32
    %c0_i32_1 = arith.constant 0 : i32
    return %arg0, %c0_i32, %c0_i32_0 : i32, i32, i32
  }
  func.func @transform_1(%arg0: i32) -> (i32, i32) {
    %c0_i32 = arith.constant 0 : i32
    %c0_i32_0 = arith.constant 0 : i32
    %c0_i32_1 = arith.constant 0 : i32
    return %c0_i32, %c0_i32_0 : i32, i32
  }
  func.func @transform_2(%arg0: i32) -> (i32, i32) {
    %c0_i32 = arith.constant 0 : i32
    %c0_i32_0 = arith.constant 0 : i32
    %c0_i32_1 = arith.constant 0 : i32
    return %c0_i32, %c0_i32_0 : i32, i32
  }
  func.func @transform_3(%arg0: i32) -> (i32, i32) {
    %c0_i32 = arith.constant 0 : i32
    %c0_i32_0 = arith.constant 0 : i32
    %c0_i32_1 = arith.constant 0 : i32
    return %c0_i32, %c0_i32_0 : i32, i32
  }
  func.func @transform_4(%arg0: i32) -> (i32, i32) {
    %c0_i32 = arith.constant 0 : i32
    %c0_i32_0 = arith.constant 0 : i32
    %c0_i32_1 = arith.constant 0 : i32
    return %c0_i32, %c0_i32_0 : i32, i32
  }
  func.func @transform_5(%arg0: i32) -> (i32, i32, i32) {
    %c0_i32 = arith.constant 0 : i32
    %c0_i32_0 = arith.constant 0 : i32
    %c0_i32_1 = arith.constant 0 : i32
    return %arg0, %c0_i32, %c0_i32_0 : i32, i32, i32
  }
}

</mosaic_0001>

<llo_original>
// kernel: tpu_custom_call.1
$region0: #{tpu_custom_call.1}
  #allocation0 [shape = 'u32[]', space=smem, size = 0x4, offset = 0x4, fixed_abs, tag = 'smem constant byte address 0x4 - core index']
  #allocation1 [shape = 'u32[144,128]{1,0:T(1,128)}', space=vmem, size = 0x12000, scoped, tag = 'internal scratch']
  %s0 = inlined_call_operand.hbm [shape: f32[2,8,512], index: 0, kind: input, shape index: {}]
  %s1 = inlined_call_operand.vmem [shape: f32[8,4], index: 1, kind: input, shape index: {}]
  %s2 = inlined_call_operand.vmem [shape: f32[1,4], index: 2, kind: input, shape index: {}]
  %s3 = inlined_call_operand.vmem [shape: f32[4,8], index: 3, kind: input, shape index: {}]
  %s4 = inlined_call_operand.vmem [shape: f32[1,8], index: 4, kind: input, shape index: {}]
  %s5 = inlined_call_operand.hbm [shape: f32[2,8,512], index: 5, kind: output, shape index: {}]
  %s6 = sld [smem:[#allocation0]]
  $region57: #{tpu_custom_call.1} parent=0
    _
  %s8 = ssub.s32 1, %s6
  %s9 = scalar_select 0, %s8, %s6
  $region1: #{tpu_custom_call.1} parent=0
    #allocation2 [shape = 'u8[32768]{0}', space=vmem, size = 0x8000, scoped, tag = 'input window, operand 0']
    #allocation3 [shape = 's32[2]{0}', space=sflag, size = 0x8, scoped, tag = 'scoped memory for tpu_custom_call.1']
    #allocation4 [shape = 's32[2]{0}', space=sflag, size = 0x8, scoped, tag = 'scoped memory for tpu_custom_call.1']
    #allocation5 [shape = 'u8[32768]{0}', space=vmem, size = 0x8000, scoped, tag = 'output window, operand 0']
    %10 = vsyncpa [#allocation3], 0
    %s11 = scalar_lea.sflag [#allocation3], 1
    %12 = vsyncpa %s11, 0
    %13 = vsyncpa [#allocation4], 0
    %s14 = scalar_lea.sflag [#allocation4], 1
    %15 = vsyncpa %s14, 0
    loop: start=0, step=1, limit=4
    $region2: #{tpu_custom_call.1} parent=1 // loop_pre_header
      _
    $region3: #{tpu_custom_call.1} parent=1 // loop_header
      %s17 = sphi 0, %s21
      %p18 = scmp.ge.s32.totalorder %s17, 4
      %s27 = sphi 0, %s29
      %s30 = sphi 0, %s27
      %s31 = sphi 0, %s30
      %s47 = sphi 0, %s31
      %s51 = sphi 0, %s51
      %s53 = sphi 0, %s51
      %s54 = sphi 0, %s53
      %s68 = sphi 0, %s54
      %s72 = sphi 0, %s72
      %s74 = sphi 0, %s72
      %s75 = sphi 0, %s74
      %s89 = sphi 0, %s75
      %s93 = sphi 0, %s93
      %s95 = sphi 0, %s93
      %s96 = sphi 0, %s95
      %s110 = sphi 0, %s96
      %s114 = sphi 0, %s114
      %s116 = sphi 0, %s114
      %s117 = sphi 0, %s116
      %s131 = sphi 0, %s117
      %s137 = sphi 0, %s139
      %s140 = sphi 0, %s137
      %s141 = sphi 0, %s140
      %s157 = sphi 0, %s141
    $region4: #{tpu_custom_call.1} parent=1 // loop_header_branch
      %20 = sbr.rel (%p18) target = $region8
    $region5: #{tpu_custom_call.1} parent=1 // loop_body
      %s22 = ssub.s32 %s17, 1
      %s23 = ssub.s32 %s17, 2
      %s24 = sadd.s32 %s17, 1
      %s25 = ssub.s32 %s17, %s24
      %p26 = scmp.eq.s32.totalorder %s25, 0
      %s28 = sadd.s32 %s27, 1
      %s29 = scalar_select %p26, %s27, %s28
      %p32 = pneg %p26
      %p33 = scmp.eq.s32.totalorder %s17, 1
      %p34 = por %p32, %p33
      %p35 = scmp.ne.s32.totalorder %s27, %s30
      %p36 = scmp.eq.s32.totalorder %s17, 0
      %p37 = por %p35, %p36
      %p38 = scmp.ne.s32.totalorder %s27, %s30
      %p39 = scmp.eq.s32.totalorder %s22, 1
      %p40 = por %p38, %p39
      %p41 = scmp.ne.s32.totalorder %s30, %s31
      %p42 = scmp.eq.s32.totalorder %s22, 0
      %p43 = por %p41, %p42
      %p44 = scmp.ne.s32.totalorder %s30, %s31
      %p45 = scmp.eq.s32.totalorder %s23, 1
      %p46 = por %p44, %p45
      %p48 = scmp.ne.s32.totalorder %s31, %s47
      %p49 = scmp.eq.s32.totalorder %s23, 0
      %p50 = por %p48, %p49
      %s52 = sadd.s32 %s51, 1
      %p55 = scmp.eq.s32.totalorder %s17, 1
      %p56 = scmp.ne.s32.totalorder %s51, %s53
      %p57 = scmp.eq.s32.totalorder %s17, 0
      %p58 = por %p56, %p57
      %p59 = scmp.ne.s32.totalorder %s51, %s53
      %p60 = scmp.eq.s32.totalorder %s22, 1
      %p61 = por %p59, %p60
      %p62 = scmp.ne.s32.totalorder %s53, %s54
      %p63 = scmp.eq.s32.totalorder %s22, 0
      %p64 = por %p62, %p63
      %p65 = scmp.ne.s32.totalorder %s53, %s54
      %p66 = scmp.eq.s32.totalorder %s23, 1
      %p67 = por %p65, %p66
      %p69 = scmp.ne.s32.totalorder %s54, %s68
      %p70 = scmp.eq.s32.totalorder %s23, 0
      %p71 = por %p69, %p70
      %s73 = sadd.s32 %s72, 1
      %p76 = scmp.eq.s32.totalorder %s17, 1
      %p77 = scmp.ne.s32.totalorder %s72, %s74
      %p78 = scmp.eq.s32.totalorder %s17, 0
      %p79 = por %p77, %p78
      %p80 = scmp.ne.s32.totalorder %s72, %s74
      %p81 = scmp.eq.s32.totalorder %s22, 1
      %p82 = por %p80, %p81
      %p83 = scmp.ne.s32.totalorder %s74, %s75
      %p84 = scmp.eq.s32.totalorder %s22, 0
      %p85 = por %p83, %p84
      %p86 = scmp.ne.s32.totalorder %s74, %s75
      %p87 = scmp.eq.s32.totalorder %s23, 1
      %p88 = por %p86, %p87
      %p90 = scmp.ne.s32.totalorder %s75, %s89
      %p91 = scmp.eq.s32.totalorder %s23, 0
      %p92 = por %p90, %p91
      %s94 = sadd.s32 %s93, 1
      %p97 = scmp.eq.s32.totalorder %s17, 1
      %p98 = scmp.ne.s32.totalorder %s93, %s95
      %p99 = scmp.eq.s32.totalorder %s17, 0
      %p100 = por %p98, %p99
      %p101 = scmp.ne.s32.totalorder %s93, %s95
      %p102 = scmp.eq.s32.totalorder %s22, 1
      %p103 = por %p101, %p102
      %p104 = scmp.ne.s32.totalorder %s95, %s96
      %p105 = scmp.eq.s32.totalorder %s22, 0
      %p106 = por %p104, %p105
      %p107 = scmp.ne.s32.totalorder %s95, %s96
      %p108 = scmp.eq.s32.totalorder %s23, 1
      %p109 = por %p107, %p108
      %p111 = scmp.ne.s32.totalorder %s96, %s110
      %p112 = scmp.eq.s32.totalorder %s23, 0
      %p113 = por %p111, %p112
      %s115 = sadd.s32 %s114, 1
      %p118 = scmp.eq.s32.totalorder %s17, 1
      %p119 = scmp.ne.s32.totalorder %s114, %s116
      %p120 = scmp.eq.s32.totalorder %s17, 0
      %p121 = por %p119, %p120
      %p122 = scmp.ne.s32.totalorder %s114, %s116
      %p123 = scmp.eq.s32.totalorder %s22, 1
      %p124 = por %p122, %p123
      %p125 = scmp.ne.s32.totalorder %s116, %s117
      %p126 = scmp.eq.s32.totalorder %s22, 0
      %p127 = por %p125, %p126
      %p128 = scmp.ne.s32.totalorder %s116, %s117
      %p129 = scmp.eq.s32.totalorder %s23, 1
      %p130 = por %p128, %p129
      %p132 = scmp.ne.s32.totalorder %s117, %s131
      %p133 = scmp.eq.s32.totalorder %s23, 0
      %p134 = por %p132, %p133
      %s135 = ssub.s32 %s17, %s24
      %p136 = scmp.eq.s32.totalorder %s135, 0
      %s138 = sadd.s32 %s137, 1
      %s139 = scalar_select %p136, %s137, %s138
      %p142 = pneg %p136
      %p143 = scmp.eq.s32.totalorder %s17, 1
      %p144 = por %p142, %p143
      %p145 = scmp.ne.s32.totalorder %s137, %s140
      %p146 = scmp.eq.s32.totalorder %s17, 0
      %p147 = por %p145, %p146
      %p148 = scmp.ne.s32.totalorder %s137, %s140
      %p149 = scmp.eq.s32.totalorder %s22, 1
      %p150 = por %p148, %p149
      %p151 = scmp.ne.s32.totalorder %s140, %s141
      %p152 = scmp.eq.s32.totalorder %s22, 0
      %p153 = por %p151, %p152
      %p154 = scmp.ne.s32.totalorder %s140, %s141
      %p155 = scmp.eq.s32.totalorder %s23, 1
      %p156 = por %p154, %p155
      %p158 = scmp.ne.s32.totalorder %s141, %s157
      %p159 = scmp.eq.s32.totalorder %s23, 0
      %p160 = por %p158, %p159
      %p161 = scmp.le.s32.totalorder 1, %s17
      %p162 = scmp.lt.s32.totalorder %s17, 3
      %p163 = pnand %p161, %p162
      %p164 = pneg %p163
      // Predicated region
      $region9: #{tpu_custom_call.1} parent=5 // pred_check
        _
      $region10: #{tpu_custom_call.1} parent=5 // pred_check_branch
        %166 = sbr.rel (%p163) target = $region12
      $region11: #{tpu_custom_call.1} parent=5 // pred_region
        %s167 = ssub.s32 %s17, 1
        // Predicated region
        $region13: #{tpu_custom_call.1} parent=11 // pred_check
          %p168 = pneg %p64
        $region14: #{tpu_custom_call.1} parent=11 // pred_check_branch
          %170 = sbr.rel (%p168) target = $region16
        $region15: #{tpu_custom_call.1} parent=11 // pred_region
          _
        $region16: #{tpu_custom_call.1} parent=11 // pred_fallthru
          _
        // Predicated region
        $region17: #{tpu_custom_call.1} parent=11 // pred_check
          %p171 = pneg %p85
        $region18: #{tpu_custom_call.1} parent=11 // pred_check_branch
          %173 = sbr.rel (%p171) target = $region20
        $region19: #{tpu_custom_call.1} parent=11 // pred_region
          _
        $region20: #{tpu_custom_call.1} parent=11 // pred_fallthru
          _
        // Predicated region
        $region21: #{tpu_custom_call.1} parent=11 // pred_check
          %p174 = pneg %p106
        $region22: #{tpu_custom_call.1} parent=11 // pred_check_branch
          %176 = sbr.rel (%p174) target = $region24
        $region23: #{tpu_custom_call.1} parent=11 // pred_region
          _
        $region24: #{tpu_custom_call.1} parent=11 // pred_fallthru
          _
        // Predicated region
        $region25: #{tpu_custom_call.1} parent=11 // pred_check
          %p177 = pneg %p127
        $region26: #{tpu_custom_call.1} parent=11 // pred_check_branch
          %179 = sbr.rel (%p177) target = $region28
        $region27: #{tpu_custom_call.1} parent=11 // pred_region
          _
        $region28: #{tpu_custom_call.1} parent=11 // pred_fallthru
          _
      $region12: #{tpu_custom_call.1} parent=5 // pred_fallthru
        _
      %p180 = scmp.lt.s32.totalorder %s17, 2
      // Predicated region
      $region29: #{tpu_custom_call.1} parent=5 // pred_check
        %p181 = pneg %p180
      $region30: #{tpu_custom_call.1} parent=5 // pred_check_branch
        %183 = sbr.rel (%p181) target = $region32
      $region31: #{tpu_custom_call.1} parent=5 // pred_region
        // Predicated region
        $region33: #{tpu_custom_call.1} parent=31 // pred_check
          %p184 = pneg %p37
        $region34: #{tpu_custom_call.1} parent=31 // pred_check_branch
          %186 = sbr.rel (%p184) target = $region36
        $region35: #{tpu_custom_call.1} parent=31 // pred_region
          %s187 = sand.u32 %s27, 1
          %s188 = scalar_lea.sflag [#allocation3], %s187
          %s189 = sand.u32 %s27, 1
          %s190 = smul.addr %s189, 32
          %s191 = scalar_lea.vmem [#allocation2], %s190
          %s193 = ssub.s32 512, 512
          %194 = vsyncadd %s188, %s193
          %s195 = smul.addr %s17, 4
          %s196 = smul.addr %s195, 128
          %s197 = scalar_lea.hbm %s0, %s196
          %s199 = sshll.u32 %s191, 4
          %s200 = int_to_ptr.vmem [resolvable:$true] %s199
          %202 = dma.hbm_to_vmem [thread:$0]  %s197, 512, %s200, %s188
        $region36: #{tpu_custom_call.1} parent=31 // pred_fallthru
          _
      $region32: #{tpu_custom_call.1} parent=5 // pred_fallthru
        _
      %p203 = scmp.le.s32.totalorder 1, %s17
      %p204 = scmp.lt.s32.totalorder %s17, 3
      %p205 = pnand %p203, %p204
      %p206 = pneg %p205
      // Predicated region
      $region37: #{tpu_custom_call.1} parent=5 // pred_check
        _
      $region38: #{tpu_custom_call.1} parent=5 // pred_check_branch
        %208 = sbr.rel (%p205) target = $region40
      $region39: #{tpu_custom_call.1} parent=5 // pred_region
        %s209 = ssub.s32 %s17, 1
        %s210 = sand.u32 %s30, 1
        %s211 = scalar_lea.sflag [#allocation3], %s210
        %s212 = sand.u32 %s30, 1
        %s213 = smul.addr %s212, 32
        %s214 = scalar_lea.vmem [#allocation2], %s213
        // Predicated region
        $region41: #{tpu_custom_call.1} parent=39 // pred_check
          %p215 = pneg %p43
        $region42: #{tpu_custom_call.1} parent=39 // pred_check_branch
          %217 = sbr.rel (%p215) target = $region44
        $region43: #{tpu_custom_call.1} parent=39 // pred_region
          %218 = dma.done %s211, 512
        $region44: #{tpu_custom_call.1} parent=39 // pred_fallthru
          _
        %s219 = sand.u32 %s30, 1
        %s220 = scalar_lea.sflag [#allocation3], %s219
        %s221 = sand.u32 %s30, 1
        %s222 = smul.addr %s221, 32
        %s223 = scalar_lea.vmem [#allocation2], %s222
        %p224 = pneg %p43
        %p225 = pneg %p40
        %p226 = pneg %p64
        %p227 = pneg %p61
        %p228 = pneg %p85
        %p229 = pneg %p82
        %p230 = pneg %p106
        %p231 = pneg %p103
        %p232 = pneg %p127
        %p233 = pneg %p124
        %p234 = pneg %p153
        %p235 = pneg %p150
        %s236 = sand.u32 %s140, 1
        %s237 = scalar_lea.sflag [#allocation4], %s236
        %s238 = sand.u32 %s140, 1
        %s239 = smul.addr %s238, 32
        %s240 = scalar_lea.vmem [#allocation5], %s239
        %v241 = vld [vmem:[%s214] sm:$0xff]
        %v242 = vld [vmem:[%s214 + $0x8] sm:$0xff]
        %v243 = vld [vmem:[%s214 + $0x10] sm:$0xff]
        %v244 = vld [vmem:[%s214 + $0x18] sm:$0xff]
        %v245 = vadd.f32 %v241, %v242
        %v246 = vadd.f32 %v245, %v243
        %v247 = vadd.f32 %v246, %v244
        %248 = vadd.xlane.f32.xlu0 %v247
        %v249 = vpop.xlane.xlu0 %248
        %v250 = vmul.f32 %v249, 0.001953125
        %v251 = vld [vmem:[%s1] sm:$0xff]
        %v252 = vld [vmem:[%s2] sm:$0x1]
        %v254 = vlaneseq
        %v255 = vand.u32 %v254, 127
        %v256 = vlaneseq
        %v257 = vshrl.u32 %v256, 7
        %v258 = vsub.s32 %v255, %v257
        %v259 = vrot.slane %v250, %v258
        %vm260 = vcmask 64512
        %v261 = vsel %vm260, %v259, 0
        %263 = vmatprep.subr.mxu0 0.0
        %264 = vmatpush1.msra.mxu0 0.0
        %265 = vmatprep.subr.mxu0 0.0
        %266 = vmatpush1.msra.mxu0 0.0
        %267 = vmatprep.subr.mxu0 0.0
        %268 = vmatpush1.msra.mxu0 0.0
        %269 = vmatprep.subr.mxu0 0.0
        %270 = vmatpush1.msra.mxu0 0.0
        %271 = vmatprep.subr.mxu0 0.0
        %272 = vmatpush1.msra.mxu0 0.0
        %273 = vmatprep.subr.mxu0 0.0
        %274 = vmatpush1.msra.mxu0 0.0
        %275 = vmatprep.subr.mxu0 0.0
        %276 = vmatpush1.msra.mxu0 0.0
        %277 = vmatprep.subr.mxu0 0.0
        %278 = vmatpush1.msra.mxu0 0.0
        %279 = vmatprep.subr.mxu0 0.0
        %280 = vmatpush1.msra.mxu0 0.0
        %281 = vmatprep.subr.mxu0 0.0
        %282 = vmatpush1.msra.mxu0 0.0
        %283 = vmatprep.subr.mxu0 0.0
        %284 = vmatpush1.msra.mxu0 0.0
        %285 = vmatprep.subr.mxu0 0.0
        %286 = vmatpush1.msra.mxu0 0.0
        %287 = vmatprep.subr.mxu0 0.0
        %288 = vmatpush1.msra.mxu0 0.0
        %289 = vmatprep.subr.mxu0 0.0
        %290 = vmatpush1.msra.mxu0 0.0
        %291 = vmatprep.subr.mxu0 0.0
        %292 = vmatpush1.msra.mxu0 0.0
        %293 = vmatprep.subr.mxu0 0.0
        %294 = vmatpush1.msra.mxu0 %v251
        %295 = vmatprep.subr.mxu0 0.0
        %296 = vmatpush2.msra.mxu0 0.0
        %297 = vmatprep.subr.mxu0 0.0
        %298 = vmatpush2.msra.mxu0 0.0
        %299 = vmatprep.subr.mxu0 0.0
        %300 = vmatpush2.msra.mxu0 0.0
        %301 = vmatprep.subr.mxu0 0.0
        %302 = vmatpush2.msra.mxu0 0.0
        %303 = vmatprep.subr.mxu0 0.0
        %304 = vmatpush2.msra.mxu0 0.0
        %305 = vmatprep.subr.mxu0 0.0
        %306 = vmatpush2.msra.mxu0 0.0
        %307 = vmatprep.subr.mxu0 0.0
        %308 = vmatpush2.msra.mxu0 0.0
        %309 = vmatprep.subr.mxu0 0.0
        %310 = vmatpush2.msra.mxu0 0.0
        %311 = vmatprep.subr.mxu0 0.0
        %312 = vmatpush2.msra.mxu0 0.0
        %313 = vmatprep.subr.mxu0 0.0
        %314 = vmatpush2.msra.mxu0 0.0
        %315 = vmatprep.subr.mxu0 0.0
        %316 = vmatpush2.msra.mxu0 0.0
        %317 = vmatprep.subr.mxu0 0.0
        %318 = vmatpush2.msra.mxu0 0.0
        %319 = vmatprep.subr.mxu0 0.0
        %320 = vmatpush2.msra.mxu0 0.0
        %321 = vmatprep.subr.mxu0 0.0
        %322 = vmatpush2.msra.mxu0 0.0
        %323 = vmatprep.subr.mxu0 0.0
        %324 = vmatpush2.msra.mxu0 0.0
        %325 = vmatprep.subr.mxu0 0.0
        %326 = vmatpush2.msra.mxu0 0.0
        %327 = vmatprep.mubr.f32.mxu0 0.0
        %328 = vmatmul.mubr.f32.gmra.mxu0 %v261
        %v329 = vpop.f32.mrf.mxu0
        %v330 = vadd.f32 %v252, %v329
        %v331 = vpop.f32.mrf.mxu0
        %332 = vdwg.mxu0
        %v333 = vmax.f32 %v330, 0.0
        %v334 = vld [vmem:[%s3] sm:$0xf]
        %v335 = vld [vmem:[%s4] sm:$0x1]
        %vm336 = vcmask 31744
        %v338 = vsel %vm336, %v333, 0
        %vm340 = vcmask 1043456
        %v342 = vsel %vm340, %v334, 0
        %344 = vmatprep.subr.mxu0 0.0
        %345 = vmatpush1.msra.mxu0 0.0
        %346 = vmatprep.subr.mxu0 0.0
        %347 = vmatpush1.msra.mxu0 0.0
        %348 = vmatprep.subr.mxu0 0.0
        %349 = vmatpush1.msra.mxu0 0.0
        %350 = vmatprep.subr.mxu0 0.0
        %351 = vmatpush1.msra.mxu0 0.0
        %352 = vmatprep.subr.mxu0 0.0
        %353 = vmatpush1.msra.mxu0 0.0
        %354 = vmatprep.subr.mxu0 0.0
        %355 = vmatpush1.msra.mxu0 0.0
        %356 = vmatprep.subr.mxu0 0.0
        %357 = vmatpush1.msra.mxu0 0.0
        %358 = vmatprep.subr.mxu0 0.0
        %359 = vmatpush1.msra.mxu0 0.0
        %360 = vmatprep.subr.mxu0 0.0
        %361 = vmatpush1.msra.mxu0 0.0
        %362 = vmatprep.subr.mxu0 0.0
        %363 = vmatpush1.msra.mxu0 0.0
        %364 = vmatprep.subr.mxu0 0.0
        %365 = vmatpush1.msra.mxu0 0.0
        %366 = vmatprep.subr.mxu0 0.0
        %367 = vmatpush1.msra.mxu0 0.0
        %368 = vmatprep.subr.mxu0 0.0
        %369 = vmatpush1.msra.mxu0 0.0
        %370 = vmatprep.subr.mxu0 0.0
        %371 = vmatpush1.msra.mxu0 0.0
        %372 = vmatprep.subr.mxu0 0.0
        %373 = vmatpush1.msra.mxu0 0.0
        %374 = vmatprep.subr.mxu0 0.0
        %375 = vmatpush1.msra.mxu0 %v342
        %376 = vmatprep.subr.mxu0 0.0
        %377 = vmatpush2.msra.mxu0 0.0
        %378 = vmatprep.subr.mxu0 0.0
        %379 = vmatpush2.msra.mxu0 0.0
        %380 = vmatprep.subr.mxu0 0.0
        %381 = vmatpush2.msra.mxu0 0.0
        %382 = vmatprep.subr.mxu0 0.0
        %383 = vmatpush2.msra.mxu0 0.0
        %384 = vmatprep.subr.mxu0 0.0
        %385 = vmatpush2.msra.mxu0 0.0
        %386 = vmatprep.subr.mxu0 0.0
        %387 = vmatpush2.msra.mxu0 0.0
        %388 = vmatprep.subr.mxu0 0.0
        %389 = vmatpush2.msra.mxu0 0.0
        %390 = vmatprep.subr.mxu0 0.0
        %391 = vmatpush2.msra.mxu0 0.0
        %392 = vmatprep.subr.mxu0 0.0
        %393 = vmatpush2.msra.mxu0 0.0
        %394 = vmatprep.subr.mxu0 0.0
        %395 = vmatpush2.msra.mxu0 0.0
        %396 = vmatprep.subr.mxu0 0.0
        %397 = vmatpush2.msra.mxu0 0.0
        %398 = vmatprep.subr.mxu0 0.0
        %399 = vmatpush2.msra.mxu0 0.0
        %400 = vmatprep.subr.mxu0 0.0
        %401 = vmatpush2.msra.mxu0 0.0
        %402 = vmatprep.subr.mxu0 0.0
        %403 = vmatpush2.msra.mxu0 0.0
        %404 = vmatprep.subr.mxu0 0.0
        %405 = vmatpush2.msra.mxu0 0.0
        %406 = vmatprep.subr.mxu0 0.0
        %407 = vmatpush2.msra.mxu0 0.0
        %408 = vmatprep.mubr.f32.mxu0 0.0
        %409 = vmatmul.mubr.f32.gmra.mxu0 %v338
        %v410 = vpop.f32.mrf.mxu0
        %v411 = vadd.f32 %v335, %v410
        %v412 = vpop.f32.mrf.mxu0
        %413 = vdwg.mxu0
        %v414 = vxor.u32 %v411, 2147483648
        %v415 = vmul.f32 %v414, 1.442695
        %v416 = vpow.pop %v415
        %v417 = vadd.f32 %v416, 1.0
        %v418 = vrcp.pop %v417
        %v419 = vmul.f32 1.0, %v418
        %v420 = vlaneseq
        %v421 = vshrl.u32 %v420, 7
        %v422 = vsub.s32 0, %v421
        %v423 = vrot.slane %v419, %v422
        %425 = vbcast.lane.b32.xlu0 %v423, 256
        %v426 = vpop.permute.xlu0 %425
        %v427 = vmul.f32 %v241, %v426
        %v428 = vmul.f32 %v242, %v426
        %v429 = vmul.f32 %v243, %v426
        %v430 = vmul.f32 %v244, %v426
        %431 = vst [vmem:[%s240] sm:$0xff] %v427
        %432 = vst [vmem:[%s240 + $0x8] sm:$0xff] %v428
        %433 = vst [vmem:[%s240 + $0x10] sm:$0xff] %v429
        %434 = vst [vmem:[%s240 + $0x18] sm:$0xff] %v430
        %s435 = sand.u32 %s140, 1
        %s436 = scalar_lea.sflag [#allocation4], %s435
        %s437 = sand.u32 %s140, 1
        %s438 = smul.addr %s437, 32
        %s439 = scalar_lea.vmem [#allocation5], %s438
        // Predicated region
        $region45: #{tpu_custom_call.1} parent=39 // pred_check
          %p440 = pneg %p150
        $region46: #{tpu_custom_call.1} parent=39 // pred_check_branch
          %442 = sbr.rel (%p440) target = $region48
        $region47: #{tpu_custom_call.1} parent=39 // pred_region
          %s444 = ssub.s32 512, 512
          %445 = vsyncadd %s436, %s444
          %s446 = smul.addr %s22, 4
          %s447 = smul.addr %s446, 128
          %s448 = scalar_lea.hbm %s5, %s447
          %s450 = sshll.u32 %s439, 4
          %s451 = int_to_ptr.vmem [resolvable:$true] %s450
          %453 = dma.vmem_to_hbm [thread:$0]  %s451, 512, %s448, %s436
        $region48: #{tpu_custom_call.1} parent=39 // pred_fallthru
          _
      $region40: #{tpu_custom_call.1} parent=5 // pred_fallthru
        _
      %p454 = scmp.le.s32.totalorder 2, %s17
      // Predicated region
      $region49: #{tpu_custom_call.1} parent=5 // pred_check
        %p455 = pneg %p454
      $region50: #{tpu_custom_call.1} parent=5 // pred_check_branch
        %457 = sbr.rel (%p455) target = $region52
      $region51: #{tpu_custom_call.1} parent=5 // pred_region
        %s458 = ssub.s32 %s17, 2
        // Predicated region
        $region53: #{tpu_custom_call.1} parent=51 // pred_check
          %p459 = pneg %p156
        $region54: #{tpu_custom_call.1} parent=51 // pred_check_branch
          %461 = sbr.rel (%p459) target = $region56
        $region55: #{tpu_custom_call.1} parent=51 // pred_region
          %s462 = sand.u32 %s141, 1
          %s463 = scalar_lea.sflag [#allocation4], %s462
          %s464 = sand.u32 %s141, 1
          %s465 = smul.addr %s464, 32
          %s466 = scalar_lea.vmem [#allocation5], %s465
          %467 = dma.done %s463, 512
        $region56: #{tpu_custom_call.1} parent=51 // pred_fallthru
          _
      $region52: #{tpu_custom_call.1} parent=5 // pred_fallthru
        _
    $region6: #{tpu_custom_call.1} parent=1 // loop_footer
      %s21 = sadd.s32 1, %s17
    $region7: #{tpu_custom_call.1} parent=1 // loop_footer_branch
      %16 = sbr.rel target = $region3
    $region8: #{tpu_custom_call.1} parent=1 // loop_exit
      _
    %468 = vsyncpa [#allocation3], 1
    %s469 = scalar_lea.sflag [#allocation3], 1
    %470 = vsyncpa %s469, 1
    %471 = vsyncpa [#allocation4], 1
    %s472 = scalar_lea.sflag [#allocation4], 1
    %473 = vsyncpa %s472, 1

</llo_original>
